<compile_context>
chip_gen: v7x
topology: tpu7x:2x2x1
jax: 0.10.0
libtpu: 0.0.40
codegen_flags: <defaults>
</compile_context>

<pallas_src>
import jax
import jax.numpy as jnp
import numpy as np
from jax.experimental import pallas as pl
from jax.experimental.pallas import tpu as pltpu


def _pooler_kernel(x_ref, valid_ref, invcnt_ref, mean_ref, start_ref, max_ref):
    # x_ref:      (TS, TB, TH) input tile (ragged boundary blocks may hold garbage)
    # valid_ref:  (TS, TB, 1)  f32, 1.0 == valid token, 0.0 == padding (S-padded w/ 0)
    # invcnt_ref: (TB, 1)      f32, 1 / per-batch valid-token count (precomputed)
    # mean_ref / start_ref / max_ref: (TB, TH) f32 outputs, resident across the S axis
    k = pl.program_id(2)

    @pl.when(k == 0)
    def _init():
        mean_ref[...] = jnp.zeros_like(mean_ref)
        max_ref[...] = jnp.full_like(max_ref, -jnp.inf)
        # "Start" token: input[0] is the first row of the first S tile.
        start_ref[...] = x_ref[0].astype(start_ref.dtype)

    x = x_ref[...].astype(jnp.float32)          # (TS, TB, TH)
    valid = valid_ref[...] > 0.0                # (TS, TB, 1), lane-broadcasts over TH

    # Select-based masking: NaN/Inf-safe against garbage in ragged boundary blocks.
    mean_ref[...] += jnp.sum(jnp.where(valid, x, 0.0), axis=0)
    max_ref[...] = jnp.maximum(
        max_ref[...], jnp.max(jnp.where(valid, x, -jnp.inf), axis=0))

    @pl.when(k == pl.num_programs(2) - 1)
    def _finalize():
        mean_ref[...] = mean_ref[...] * invcnt_ref[...]


def _round_up(x, m):
    return (x + m - 1) // m * m


def _choose_tiles(S, B, H, itemsize):
    # Lane axis: keep H whole (contiguous HBM runs).
    TH = H
    # Sublane axis: 8-row tiles when B allows >1 tile; otherwise the full B
    # (block dim == full array dim is always legal).
    TB = 8 if B > 8 else B
    # v7x megacore: ensure >= 2 blocks on the parallel axes when possible.
    if B <= 8 and H >= 256 and H % 128 == 0:
        TH = _round_up(H // 2, 128)
    # S tile from an ~8 MiB per-step budget: x tile + lane-padded mask tile
    # ((TS, TB, 1) pads its last dim to 128 lanes in VMEM).
    budget = 8 * 1024 * 1024
    bytes_per_s_row = TB * TH * itemsize + _round_up(TB, 8) * 128 * 4
    ts_max = max(1, budget // bytes_per_s_row)
    n_k = pl.cdiv(S, min(S, ts_max))
    TS = pl.cdiv(S, n_k)            # balanced split: no wasted rounded-up rows
    return TS, TB, TH


def mean_start_max_pooler(x, padding_mask):
    """x: (S, B, H); padding_mask: (S, B) bool, True == PAD. Returns (B, 3*H)."""
    S, B, H = x.shape
    out_dtype = x.dtype
    itemsize = jnp.dtype(x.dtype).itemsize

    TS, TB, TH = _choose_tiles(S, B, H, itemsize)
    grid = (pl.cdiv(B, TB), pl.cdiv(H, TH), pl.cdiv(S, TS))
    S_m = grid[2] * TS              # mask padded along S only (tiny array)

    valid = (~padding_mask).astype(jnp.float32)                    # (S, B)
    inv_counts = (1.0 / jnp.sum(valid, axis=0))[:, None]           # (B, 1) f32, exact
    valid3 = jnp.pad(valid, ((0, S_m - S), (0, 0)))[:, :, None]    # (S_m, B, 1)

    grid_spec = pltpu.PrefetchScalarGridSpec(
        num_scalar_prefetch=0,
        grid=grid,
        in_specs=[
            pl.BlockSpec((TS, TB, TH), lambda i, j, k: (k, i, j)),   # x (unpadded)
            pl.BlockSpec((TS, TB, 1), lambda i, j, k: (k, i, 0)),    # validity
            pl.BlockSpec((TB, 1), lambda i, j, k: (i, 0)),           # 1/count
        ],
        out_specs=[
            pl.BlockSpec((TB, TH), lambda i, j, k: (i, j)),          # mean
            pl.BlockSpec((TB, TH), lambda i, j, k: (i, j)),          # start
            pl.BlockSpec((TB, TH), lambda i, j, k: (i, j)),          # max
        ],
    )

    cost = pl.CostEstimate(
        flops=4 * S * B * H,
        transcendentals=0,
        bytes_accessed=(S * B * H * itemsize + S_m * B * 4
                        + 3 * B * H * 4 + B * 4),
    )

    mean_p, start_p, max_p = pl.pallas_call(
        _pooler_kernel,
        out_shape=(
            jax.ShapeDtypeStruct((B, H), jnp.float32),
            jax.ShapeDtypeStruct((B, H), jnp.float32),
            jax.ShapeDtypeStruct((B, H), jnp.float32),
        ),
        grid_spec=grid_spec,
        compiler_params=pltpu.CompilerParams(
            dimension_semantics=("parallel", "parallel", "arbitrary"),
            vmem_limit_bytes=32 * 1024 * 1024,
        ),
        cost_estimate=cost,
    )(x, valid3, inv_counts)

    # Tiny layout-only concat + cast back to the input dtype, once, in XLA.
    return jnp.concatenate([mean_p, start_p, max_p], axis=-1).astype(out_dtype)


def _reference(x, padding_mask):
    valid = (~padding_mask)[..., None]
    vm = valid.astype(x.dtype)
    mean = jnp.sum(x * vm, axis=0) / jnp.sum(vm, axis=0)
    start = x[0]
    masked = jnp.where(valid, x, -jnp.inf)
    mx = jnp.max(masked, axis=0)
    return jnp.concatenate([mean, start, mx], axis=-1)


if __name__ == "__main__":
    S, B, H = 8, 2, 32
    key = jax.random.PRNGKey(0)
    x = jax.random.normal(key, (S, B, H), dtype=jnp.float32)

    # True == PAD. Give each batch element a different valid length (>= 1).
    lengths = jnp.array([8, 5], dtype=jnp.int32)
    padding_mask = jnp.arange(S)[:, None] >= lengths[None, :]   # (S, B) bool

    out = mean_start_max_pooler(x, padding_mask)
    out = jax.block_until_ready(out)

    ref = _reference(x, padding_mask)
    assert out.shape == (B, 3 * H)
    assert np.allclose(np.asarray(out), np.asarray(ref), atol=1e-5, rtol=1e-5)
    print("KERNEL_OK")
</pallas_src>

<mosaic_0001>
module attributes {stable_mosaic.version = 11 : i64} {
  func.func @_pooler_kernel(%arg0: i32, %arg1: i32, %arg2: i32, %arg3: memref<8x2x32xf32, #tpu.memory_space<vmem>>, %arg4: memref<8x2x1xf32, #tpu.memory_space<vmem>>, %arg5: memref<2x1xf32, #tpu.memory_space<vmem>>, %arg6: memref<2x32xf32, #tpu.memory_space<vmem>>, %arg7: memref<2x32xf32, #tpu.memory_space<vmem>>, %arg8: memref<2x32xf32, #tpu.memory_space<vmem>>) attributes {dimension_semantics = [#tpu.dimension_semantics<parallel>, #tpu.dimension_semantics<parallel>, #tpu.dimension_semantics<arbitrary>], iteration_bounds = array<i64: 1, 1, 1>, scalar_prefetch = 0 : i64, scratch_operands = 0 : i64, tpu.core_type = #tpu.core_type<tc>, window_params = [{transform_indices = @transform_0, window_bounds = array<i64: 8, 2, 32>}, {transform_indices = @transform_1, window_bounds = array<i64: 8, 2, 1>}, {transform_indices = @transform_2, window_bounds = array<i64: 2, 1>}, {transform_indices = @transform_3, window_bounds = array<i64: 2, 32>}, {transform_indices = @transform_4, window_bounds = array<i64: 2, 32>}, {transform_indices = @transform_5, window_bounds = array<i64: 2, 32>}]} {
    %c0_i32 = arith.constant 0 : i32
    %0 = arith.cmpi eq, %arg2, %c0_i32 : i32
    %1 = arith.extui %0 : i1 to i32
    %c0_i32_0 = arith.constant 0 : i32
    %2 = arith.cmpi ne, %1, %c0_i32_0 : i32
    scf.if %2 {
      %cst_20 = arith.constant 0.000000e+00 : f32
      %26 = vector.broadcast %cst_20 : f32 to vector<2x32xf32>
      %c0_21 = arith.constant 0 : index
      %c0_22 = arith.constant 0 : index
      %27 = vector.load %arg6[%c0_21, %c0_22] : memref<2x32xf32, #tpu.memory_space<vmem>>, vector<2x32xf32>
      tpu.vector_store %arg6[%c0_21, %c0_22], %26 {strides = array<i32>} : memref<2x32xf32, #tpu.memory_space<vmem>>, vector<2x32xf32>,
      %cst_23 = arith.constant 0xFF800000 : f32
      %28 = vector.broadcast %cst_23 : f32 to vector<2x32xf32>
      %c0_24 = arith.constant 0 : index
      %c0_25 = arith.constant 0 : index
      %29 = vector.load %arg8[%c0_24, %c0_25] : memref<2x32xf32, #tpu.memory_space<vmem>>, vector<2x32xf32>
      tpu.vector_store %arg8[%c0_24, %c0_25], %28 {strides = array<i32>} : memref<2x32xf32, #tpu.memory_space<vmem>>, vector<2x32xf32>,
      %c0_26 = arith.constant 0 : index
      %c0_27 = arith.constant 0 : index
      %c0_28 = arith.constant 0 : index
      %30 = vector.load %arg3[%c0_26, %c0_27, %c0_28] : memref<8x2x32xf32, #tpu.memory_space<vmem>>, vector<1x2x32xf32>
      %31 = vector.shape_cast %30 : vector<1x2x32xf32> to vector<2x32xf32>
      %c0_29 = arith.constant 0 : index
      %c0_30 = arith.constant 0 : index
      %32 = vector.load %arg7[%c0_29, %c0_30] : memref<2x32xf32, #tpu.memory_space<vmem>>, vector<2x32xf32>
      tpu.vector_store %arg7[%c0_29, %c0_30], %31 {strides = array<i32>} : memref<2x32xf32, #tpu.memory_space<vmem>>, vector<2x32xf32>,
    } else {
    }
    %c0 = arith.constant 0 : index
    %c0_1 = arith.constant 0 : index
    %c0_2 = arith.constant 0 : index
    %3 = vector.load %arg3[%c0, %c0_1, %c0_2] : memref<8x2x32xf32, #tpu.memory_space<vmem>>, vector<8x2x32xf32>
    %c0_3 = arith.constant 0 : index
    %c0_4 = arith.constant 0 : index
    %c0_5 = arith.constant 0 : index
    %4 = vector.load %arg4[%c0_3, %c0_4, %c0_5] : memref<8x2x1xf32, #tpu.memory_space<vmem>>, vector<8x2x1xf32>
    %cst = arith.constant 0.000000e+00 : f32
    %5 = vector.broadcast %cst : f32 to vector<8x2x1xf32>
    %6 = arith.cmpf ogt, %4, %5 : vector<8x2x1xf32>
    %c0_6 = arith.constant 0 : index
    %c0_7 = arith.constant 0 : index
    %7 = vector.load %arg6[%c0_6, %c0_7] : memref<2x32xf32, #tpu.memory_space<vmem>>, vector<2x32xf32>
    %cst_8 = arith.constant 0.000000e+00 : f32
    %8 = vector.shape_cast %6 : vector<8x2x1xi1> to vector<8x2x1xi1>
    %9 = vector.broadcast %8 : vector<8x2x1xi1> to vector<8x2x32xi1>
    %10 = vector.broadcast %cst_8 : f32 to vector<8x2x32xf32>
    %11 = arith.select %9, %3, %10 : vector<8x2x32xi1>, vector<8x2x32xf32>
    %cst_9 = arith.constant dense<0.000000e+00> : vector<2x32xf32>
    %12 = vector.multi_reduction <add>, %11, %cst_9 [0] : vector<8x2x32xf32> to vector<2x32xf32>
    %13 = arith.addf %7, %12 : vector<2x32xf32>
    %c0_10 = arith.constant 0 : index
    %c0_11 = arith.constant 0 : index
    %14 = vector.load %arg6[%c0_10, %c0_11] : memref<2x32xf32, #tpu.memory_space<vmem>>, vector<2x32xf32>
    tpu.vector_store %arg6[%c0_10, %c0_11], %13 {strides = array<i32>} : memref<2x32xf32, #tpu.memory_space<vmem>>, vector<2x32xf32>,
    %c0_12 = arith.constant 0 : index
    %c0_13 = arith.constant 0 : index
    %15 = vector.load %arg8[%c0_12, %c0_13] : memref<2x32xf32, #tpu.memory_space<vmem>>, vector<2x32xf32>
    %cst_14 = arith.constant 0xFF800000 : f32
    %16 = vector.shape_cast %6 : vector<8x2x1xi1> to vector<8x2x1xi1>
    %17 = vector.broadcast %16 : vector<8x2x1xi1> to vector<8x2x32xi1>
    %18 = vector.broadcast %cst_14 : f32 to vector<8x2x32xf32>
    %19 = arith.select %17, %3, %18 : vector<8x2x32xi1>, vector<8x2x32xf32>
    %cst_15 = arith.constant dense<0xFF800000> : vector<2x32xf32>
    %20 = vector.multi_reduction <maximumf>, %19, %cst_15 [0] : vector<8x2x32xf32> to vector<2x32xf32>
    %21 = arith.maximumf %15, %20 : vector<2x32xf32>
    %c0_16 = arith.constant 0 : index
    %c0_17 = arith.constant 0 : index
    %22 = vector.load %arg8[%c0_16, %c0_17] : memref<2x32xf32, #tpu.memory_space<vmem>>, vector<2x32xf32>
    tpu.vector_store %arg8[%c0_16, %c0_17], %21 {strides = array<i32>} : memref<2x32xf32, #tpu.memory_space<vmem>>, vector<2x32xf32>,
    %c0_i32_18 = arith.constant 0 : i32
    %23 = arith.cmpi eq, %arg2, %c0_i32_18 : i32
    %24 = arith.extui %23 : i1 to i32
    %c0_i32_19 = arith.constant 0 : i32
    %25 = arith.cmpi ne, %24, %c0_i32_19 : i32
    scf.if %25 {
      %c0_20 = arith.constant 0 : index
      %c0_21 = arith.constant 0 : index
      %26 = vector.load %arg6[%c0_20, %c0_21] : memref<2x32xf32, #tpu.memory_space<vmem>>, vector<2x32xf32>
      %c0_22 = arith.constant 0 : index
      %c0_23 = arith.constant 0 : index
      %27 = vector.load %arg5[%c0_22, %c0_23] : memref<2x1xf32, #tpu.memory_space<vmem>>, vector<2x1xf32>
      %28 = vector.broadcast %27 : vector<2x1xf32> to vector<2x32xf32>
      %29 = arith.mulf %26, %28 : vector<2x32xf32>
      %c0_24 = arith.constant 0 : index
      %c0_25 = arith.constant 0 : index
      %30 = vector.load %arg6[%c0_24, %c0_25] : memref<2x32xf32, #tpu.memory_space<vmem>>, vector<2x32xf32>
      tpu.vector_store %arg6[%c0_24, %c0_25], %29 {strides = array<i32>} : memref<2x32xf32, #tpu.memory_space<vmem>>, vector<2x32xf32>,
    } else {
    }
    return
  }
  func.func @transform_0(%arg0: i32, %arg1: i32, %arg2: i32) -> (i32, i32, i32) {
    %c0_i32 = arith.constant 0 : i32
    return %arg2, %arg0, %arg1 : i32, i32, i32
  }
  func.func @transform_1(%arg0: i32, %arg1: i32, %arg2: i32) -> (i32, i32, i32) {
    %c0_i32 = arith.constant 0 : i32
    %c0_i32_0 = arith.constant 0 : i32
    return %arg2, %arg0, %c0_i32 : i32, i32, i32
  }
  func.func @transform_2(%arg0: i32, %arg1: i32, %arg2: i32) -> (i32, i32) {
    %c0_i32 = arith.constant 0 : i32
    %c0_i32_0 = arith.constant 0 : i32
    return %arg0, %c0_i32 : i32, i32
  }
  func.func @transform_3(%arg0: i32, %arg1: i32, %arg2: i32) -> (i32, i32) {
    %c0_i32 = arith.constant 0 : i32
    return %arg0, %arg1 : i32, i32
  }
  func.func @transform_4(%arg0: i32, %arg1: i32, %arg2: i32) -> (i32, i32) {
    %c0_i32 = arith.constant 0 : i32
    return %arg0, %arg1 : i32, i32
  }
  func.func @transform_5(%arg0: i32, %arg1: i32, %arg2: i32) -> (i32, i32) {
    %c0_i32 = arith.constant 0 : i32
    return %arg0, %arg1 : i32, i32
  }
}

</mosaic_0001>

<llo_original>
// kernel: tpu_custom_call.1
$region0: #{tpu_custom_call.1}
  #allocation0 [shape = 'u32[]', space=smem, size = 0x4, offset = 0x4, fixed_abs, tag = 'smem constant byte address 0x4 - core index']
  #allocation1 [shape = 'u32[144,128]{1,0:T(1,128)}', space=vmem, size = 0x12000, scoped, tag = 'internal scratch']
  %s0 = inlined_call_operand.vmem [shape: f32[8,2,32], index: 0, kind: input, shape index: {}]
  %s1 = inlined_call_operand.vmem [shape: f32[8,2,1], index: 1, kind: input, shape index: {}]
  %s2 = inlined_call_operand.vmem [shape: f32[2,1], index: 2, kind: input, shape index: {}]
  %s3 = inlined_call_operand.hbm [shape: f32[2,32], index: 3, kind: output, shape index: {0}]
  %s4 = inlined_call_operand.hbm [shape: f32[2,32], index: 4, kind: output, shape index: {1}]
  %s5 = inlined_call_operand.hbm [shape: f32[2,32], index: 5, kind: output, shape index: {2}]
  %6 = xla_tuple %s3, %s4, %s5
  %s7 = sld [smem:[#allocation0]]
  $region46: #{tpu_custom_call.1} parent=0
    _
  %s9 = ssub.s32 1, %s7
  %s10 = scalar_select 0, %s9, %s7
  $region1: #{tpu_custom_call.1} parent=0
    #allocation2 [shape = 'u8[1024]{0}', space=vmem, size = 0x400, scoped, tag = 'output window, operand 0, single buffered']
    #allocation3 [shape = 's32[1]{0}', space=sflag, size = 0x4, scoped, tag = 'scoped memory for tpu_custom_call.1']
    #allocation4 [shape = 'u8[1024]{0}', space=vmem, size = 0x400, scoped, tag = 'output window, operand 1, single buffered']
    #allocation5 [shape = 's32[1]{0}', space=sflag, size = 0x4, scoped, tag = 'scoped memory for tpu_custom_call.1']
    #allocation6 [shape = 'u8[1024]{0}', space=vmem, size = 0x400, scoped, tag = 'output window, operand 2, single buffered']
    %11 = vsyncpa [#allocation3], 0
    %12 = vsyncpa [#allocation5], 0
    // Predicated region
    $region2: #{tpu_custom_call.1} parent=1 // pred_check
      _
    $region3: #{tpu_custom_call.1} parent=1 // pred_check_branch
      %14 = sbr.rel (0) target = $region5
    $region4: #{tpu_custom_call.1} parent=1 // pred_region
      _
    $region5: #{tpu_custom_call.1} parent=1 // pred_fallthru
      _
    // Predicated region
    $region6: #{tpu_custom_call.1} parent=1 // pred_check
      _
    $region7: #{tpu_custom_call.1} parent=1 // pred_check_branch
      %16 = sbr.rel (0) target = $region9
    $region8: #{tpu_custom_call.1} parent=1 // pred_region
      _
    $region9: #{tpu_custom_call.1} parent=1 // pred_fallthru
      _
    // Predicated region
    $region10: #{tpu_custom_call.1} parent=1 // pred_check
      _
    $region11: #{tpu_custom_call.1} parent=1 // pred_check_branch
      %18 = sbr.rel (0) target = $region13
    $region12: #{tpu_custom_call.1} parent=1 // pred_region
      _
    $region13: #{tpu_custom_call.1} parent=1 // pred_fallthru
      _
    %p19 = scmp.eq.s32.totalorder 0, 0
    // Predicated region
    $region14: #{tpu_custom_call.1} parent=1 // pred_check
      %p20 = pneg %p19
    $region15: #{tpu_custom_call.1} parent=1 // pred_check_branch
      %22 = sbr.rel (%p20) target = $region17
    $region16: #{tpu_custom_call.1} parent=1 // pred_region
      %vm23 = vcmask 254976
      %24 = vst.msk [vmem:[#allocation2] sm:$0x3] %vm23, 0.0
      %25 = vst.msk [vmem:[#allocation6] sm:$0x3] %vm23, -inf
      %v26 = vld [vmem:[%s0] sm:$0x3]
      %27 = vst.msk [vmem:[#allocation4] sm:$0x3] %vm23, %v26
    $region17: #{tpu_custom_call.1} parent=1 // pred_fallthru
      _
    %v28 = vld [vmem:[%s0] sm:$0x3]
    %v29 = vld [vmem:[%s0 + $0x2] sm:$0x3]
    %v30 = vld [vmem:[%s0 + $0x4] sm:$0x3]
    %v31 = vld [vmem:[%s0 + $0x6] sm:$0x3]
    %v32 = vld [vmem:[%s0 + $0x8] sm:$0x3]
    %v33 = vld [vmem:[%s0 + $0xa] sm:$0x3]
    %v34 = vld [vmem:[%s0 + $0xc] sm:$0x3]
    %v35 = vld [vmem:[%s0 + $0xe] sm:$0x3]
    %v36 = vld [vmem:[%s1] sm:$0x3]
    %v37 = vld [vmem:[%s1 + $0x2] sm:$0x3]
    %v38 = vld [vmem:[%s1 + $0x4] sm:$0x3]
    %v39 = vld [vmem:[%s1 + $0x6] sm:$0x3]
    %v40 = vld [vmem:[%s1 + $0x8] sm:$0x3]
    %v41 = vld [vmem:[%s1 + $0xa] sm:$0x3]
    %v42 = vld [vmem:[%s1 + $0xc] sm:$0x3]
    %v43 = vld [vmem:[%s1 + $0xe] sm:$0x3]
    %vm44 = vcmp.gt.f32.partialorder %v36, 0.0
    %vm45 = vcmp.gt.f32.partialorder %v37, 0.0
    %vm46 = vcmp.gt.f32.partialorder %v38, 0.0
    %vm47 = vcmp.gt.f32.partialorder %v39, 0.0
    %vm48 = vcmp.gt.f32.partialorder %v40, 0.0
    %vm49 = vcmp.gt.f32.partialorder %v41, 0.0
    %vm50 = vcmp.gt.f32.partialorder %v42, 0.0
    %vm51 = vcmp.gt.f32.partialorder %v43, 0.0
    %v52 = vld [vmem:[#allocation2] sm:$0x3]
    %v53 = vsel %vm44, 1, 0
    %v54 = vsel %vm45, 1, 0
    %v55 = vsel %vm46, 1, 0
    %v56 = vsel %vm47, 1, 0
    %v57 = vsel %vm48, 1, 0
    %v58 = vsel %vm49, 1, 0
    %v59 = vsel %vm50, 1, 0
    %v60 = vsel %vm51, 1, 0
    %61 = vset.pattern.permute.xlu0 0
    %62 = vperm.xlu0 %61, %v53
    %v63 = vpop.permute.xlu0 %62
    %64 = vset.pattern.permute.xlu0 0
    %65 = vperm.xlu0 %64, %v54
    %v66 = vpop.permute.xlu0 %65
    %67 = vset.pattern.permute.xlu0 0
    %68 = vperm.xlu0 %67, %v55
    %v69 = vpop.permute.xlu0 %68
    %70 = vset.pattern.permute.xlu0 0
    %71 = vperm.xlu0 %70, %v56
    %v72 = vpop.permute.xlu0 %71
    %73 = vset.pattern.permute.xlu0 0
    %74 = vperm.xlu0 %73, %v57
    %v75 = vpop.permute.xlu0 %74
    %76 = vset.pattern.permute.xlu0 0
    %77 = vperm.xlu0 %76, %v58
    %v78 = vpop.permute.xlu0 %77
    %79 = vset.pattern.permute.xlu0 0
    %80 = vperm.xlu0 %79, %v59
    %v81 = vpop.permute.xlu0 %80
    %82 = vset.pattern.permute.xlu0 0
    %83 = vperm.xlu0 %82, %v60
    %v84 = vpop.permute.xlu0 %83
    %vm85 = vcmp.eq.s32.totalorder %v63, 1
    %vm86 = vcmp.eq.s32.totalorder %v66, 1
    %vm87 = vcmp.eq.s32.totalorder %v69, 1
    %vm88 = vcmp.eq.s32.totalorder %v72, 1
    %vm89 = vcmp.eq.s32.totalorder %v75, 1
    %vm90 = vcmp.eq.s32.totalorder %v78, 1
    %vm91 = vcmp.eq.s32.totalorder %v81, 1
    %vm92 = vcmp.eq.s32.totalorder %v84, 1
    %v93 = vsel %vm85, %v28, 0.0
    %v94 = vsel %vm86, %v29, 0.0
    %v95 = vsel %vm87, %v30, 0.0
    %v96 = vsel %vm88, %v31, 0.0
    %v97 = vsel %vm89, %v32, 0.0
    %v98 = vsel %vm90, %v33, 0.0
    %v99 = vsel %vm91, %v34, 0.0
    %v100 = vsel %vm92, %v35, 0.0
    %vm101 = vcmask 254976
    %v102 = vsel %vm101, %v93, 0.0
    %v103 = vsel %vm101, %v94, 0.0
    %v104 = vadd.f32 %v102, %v103
    %v105 = vsel %vm101, %v95, 0.0
    %v106 = vadd.f32 %v104, %v105
    %v107 = vsel %vm101, %v96, 0.0
    %v108 = vadd.f32 %v106, %v107
    %v109 = vsel %vm101, %v97, 0.0
    %v110 = vadd.f32 %v108, %v109
    %v111 = vsel %vm101, %v98, 0.0
    %v112 = vadd.f32 %v110, %v111
    %v113 = vsel %vm101, %v99, 0.0
    %v114 = vadd.f32 %v112, %v113
    %v115 = vsel %vm101, %v100, 0.0
    %v116 = vadd.f32 %v114, %v115
    %v117 = vadd.f32 %v52, %v116
    %118 = vst.msk [vmem:[#allocation2] sm:$0x3] %vm101, %v117
    %v119 = vld [vmem:[#allocation6] sm:$0x3]
    %v120 = vsel %vm85, %v28, -inf
    %v121 = vsel %vm86, %v29, -inf
    %v122 = vsel %vm87, %v30, -inf
    %v123 = vsel %vm88, %v31, -inf
    %v124 = vsel %vm89, %v32, -inf
    %v125 = vsel %vm90, %v33, -inf
    %v126 = vsel %vm91, %v34, -inf
    %v127 = vsel %vm92, %v35, -inf
    %v128 = vsel %vm101, %v120, -inf
    %v129 = vsel %vm101, %v121, -inf
    %v130 = vsel %vm101, %v122, -inf
    %v131 = vsel %vm101, %v123, -inf
    %v132 = vsel %vm101, %v124, -inf
    %v133 = vmax.f32 %v128, %v132
    %v134 = vsel %vm101, %v125, -inf
    %v135 = vmax.f32 %v129, %v134
    %v136 = vsel %vm101, %v126, -inf
    %v137 = vmax.f32 %v130, %v136
    %v138 = vsel %vm101, %v127, -inf
    %v139 = vmax.f32 %v131, %v138
    %v140 = vmax.f32 %v133, %v135
    %v141 = vmax.f32 %v137, %v139
    %v142 = vmax.f32 %v140, %v141
    %v143 = vmax.f32 %v119, %v142
    %144 = vst.msk [vmem:[#allocation6] sm:$0x3] %vm101, %v143
    // Predicated region
    $region18: #{tpu_custom_call.1} parent=1 // pred_check
      %p145 = pneg %p19
    $region19: #{tpu_custom_call.1} parent=1 // pred_check_branch
      %147 = sbr.rel (%p145) target = $region21
    $region20: #{tpu_custom_call.1} parent=1 // pred_region
      %v148 = vld [vmem:[#allocation2] sm:$0x3]
      %v149 = vld [vmem:[%s2] sm:$0x3]
      %151 = vset.pattern.permute.xlu0 0
      %152 = vperm.xlu0 %151, %v149
      %v153 = vpop.permute.xlu0 %152
      %v155 = vmul.f32 %v148, %v153
      %156 = vst.msk [vmem:[#allocation2] sm:$0x3] %vm101, %v155
    $region21: #{tpu_custom_call.1} parent=1 // pred_fallthru
      _
    // Predicated region
    $region22: #{tpu_custom_call.1} parent=1 // pred_check
      _
    $region23: #{tpu_custom_call.1} parent=1 // pred_check_branch
      %158 = sbr.rel (0) target = $region25
    $region24: #{tpu_custom_call.1} parent=1 // pred_region
      %s160 = ssub.s32 32, 32
      %161 = vsyncadd [#allocation3], %s160
      %s163 = sshll.u32 [#allocation2], 4
      %s164 = int_to_ptr.vmem [resolvable:$true] %s163
      %166 = dma.vmem_to_hbm [thread:$0]  %s164, 32, %s3, [#allocation3]
    $region25: #{tpu_custom_call.1} parent=1 // pred_fallthru
      _
    // Predicated region
    $region26: #{tpu_custom_call.1} parent=1 // pred_check
      _
    $region27: #{tpu_custom_call.1} parent=1 // pred_check_branch
      %168 = sbr.rel (0) target = $region29
    $region28: #{tpu_custom_call.1} parent=1 // pred_region
      %s170 = ssub.s32 32, 32
      %171 = vsyncadd [#allocation5], %s170
      %s173 = sshll.u32 [#allocation4], 4
      %s174 = int_to_ptr.vmem [resolvable:$true] %s173
      %176 = dma.vmem_to_hbm [thread:$0]  %s174, 32, %s4, [#allocation5]
    $region29: #{tpu_custom_call.1} parent=1 // pred_fallthru
      _
    // Predicated region
    $region30: #{tpu_custom_call.1} parent=1 // pred_check
      _
    $region31: #{tpu_custom_call.1} parent=1 // pred_check_branch
      %178 = sbr.rel (0) target = $region33
    $region32: #{tpu_custom_call.1} parent=1 // pred_region
      %s180 = ssub.s32 32, 32
      %181 = vsyncadd [#allocation5], %s180
      %s183 = sshll.u32 [#allocation6], 4
      %s184 = int_to_ptr.vmem [resolvable:$true] %s183
      %186 = dma.vmem_to_hbm [thread:$0]  %s184, 32, %s5, [#allocation5]
    $region33: #{tpu_custom_call.1} parent=1 // pred_fallthru
      _
    // Predicated region
    $region34: #{tpu_custom_call.1} parent=1 // pred_check
      _
    $region35: #{tpu_custom_call.1} parent=1 // pred_check_branch
      %188 = sbr.rel (0) target = $region37
    $region36: #{tpu_custom_call.1} parent=1 // pred_region
      %189 = dma.done [#allocation3], 32
    $region37: #{tpu_custom_call.1} parent=1 // pred_fallthru
      _
    // Predicated region
    $region38: #{tpu_custom_call.1} parent=1 // pred_check
      _
    $region39: #{tpu_custom_call.1} parent=1 // pred_check_branch
      %191 = sbr.rel (0) target = $region41
    $region40: #{tpu_custom_call.1} parent=1 // pred_region
      %192 = dma.done [#allocation5], 32
    $region41: #{tpu_custom_call.1} parent=1 // pred_fallthru
      _
    // Predicated region
    $region42: #{tpu_custom_call.1} parent=1 // pred_check
      _
    $region43: #{tpu_custom_call.1} parent=1 // pred_check_branch
      %194 = sbr.rel (0) target = $region45
    $region44: #{tpu_custom_call.1} parent=1 // pred_region
      %195 = dma.done [#allocation5], 32
    $region45: #{tpu_custom_call.1} parent=1 // pred_fallthru
      _
    %196 = vsyncpa [#allocation3], 1
    %197 = vsyncpa [#allocation5], 1

</llo_original>
